<compile_context>
chip_gen: v7x
topology: tpu7x:2x2x1
jax: 0.10.0
libtpu: 0.0.40
codegen_flags: <defaults>
</compile_context>

<pallas_src>
import functools
import math

import jax
import jax.numpy as jnp
from jax.experimental import pallas as pl
from jax.experimental.pallas import tpu as pltpu

HID_PAD = 128   # hidden size padded to one full lane tile
OUT_PAD = 128   # merged classifier|regressor output padded to one lane tile


def _silu(v):
    # tanh-form SiLU: v * sigmoid(v) == 0.5*v*(1 + tanh(v/2)).
    # One EUP transcendental per element (vs exp + reciprocal) and no exp(-v)
    # overflow for very negative inputs.
    return 0.5 * v * (1.0 + jnp.tanh(0.5 * v))


def _pos_tile(c_in, c_out, max_tile=32):
    """Positions per grid step. TP*c_in must be a multiple of 128 (lane-dense
    taps block); TP*c_out is also made a multiple of 128 when cheap."""
    # TODO(synk): for channel counts that don't divide 128 (e.g. c_in=255 in
    # the original spec) pad the channel dim instead of growing TP.
    tp = math.lcm(128, c_in) // c_in
    tp_both = math.lcm(tp, math.lcm(128, c_out) // c_out)
    return tp_both if tp_both <= max_tile else tp


# ---------------------------------------------------------------------------
# Fused kernel.  One grid step = (batch tile b) x (position block k).
#   SiLU -> 2x2 max-pool -> per-block 1x1 conv -> SiLU -> partial l1
#   (accumulated over k) -> at last k: +bias, SiLU, merged heads.
# ---------------------------------------------------------------------------
def coords_net_kernel(taps_ref, wc_ref, bc_ref, w1_ref, b1_ref, wh_ref, bh_ref,
                      out_ref, acc_ref):
    # taps_ref : (TM, n_taps, TP*c_in)  bf16  pooling-window taps, pos-major lanes
    # wc_ref   : (TP*c_in, TP*c_out)    bf16  per-block block-diag conv weight
    # bc_ref   : (1, TP*c_out)          f32
    # w1_ref   : (TP*c_out, HID_PAD)    bf16  l1 rows of this position block
    # b1_ref   : (1, HID_PAD)           f32
    # wh_ref   : (HID_PAD, OUT_PAD)     bf16  merged classifier|regressor weight
    # bh_ref   : (1, OUT_PAD)           f32
    # out_ref  : (TM, OUT_PAD)          f32
    # acc_ref  : (TM, HID_PAD)          f32   l1 pre-activation accumulator
    k = pl.program_id(1)

    @pl.when(k == 0)
    def _():
        acc_ref[...] = jnp.zeros_like(acc_ref)

    # SiLU each pooling tap (f32 math on the VPU/EUP), then max over the taps.
    t = taps_ref[...].astype(jnp.float32)
    s = _silu(t[:, 0, :])
    for j in range(1, t.shape[1]):
        s = jnp.maximum(s, _silu(t[:, j, :]))                       # (TM, TP*c_in)

    # 1x1 conv for this position block: small block-diagonal matmul whose
    # output columns are (p_local*c_out + co).
    y = jnp.dot(s.astype(wc_ref.dtype), wc_ref[...],
                preferred_element_type=jnp.float32) + bc_ref[...]   # (TM, TP*c_out)
    z = _silu(y)

    # Partial l1 contribution of this position block (the channel-major flatten
    # permutation is folded into the w1 row order in prepare_params).
    acc_ref[...] += jnp.dot(z.astype(w1_ref.dtype), w1_ref[...],
                            preferred_element_type=jnp.float32)     # (TM, HID_PAD)

    @pl.when(k == pl.num_programs(1) - 1)
    def _():
        h = _silu(acc_ref[...] + b1_ref[...])
        out_ref[...] = jnp.dot(h.astype(wh_ref.dtype), wh_ref[...],
                               preferred_element_type=jnp.float32) + bh_ref[...]


# ---------------------------------------------------------------------------
# Parameter init (PyTorch-convention shapes, deterministic, synthetic)
# ---------------------------------------------------------------------------
def init_params(key, c_in, c_out, map_size, hidden, class_size, reg_size):
    P = map_size * map_size

    def uinit(k, shape, fan_in):
        bound = 1.0 / jnp.sqrt(jnp.float32(fan_in))
        return jax.random.uniform(k, shape, jnp.float32, -bound, bound)

    ks = jax.random.split(key, 8)
    return {
        "conv_w": uinit(ks[0], (c_out, c_in), c_in),             # Conv2d (c_out,c_in,1,1)
        "conv_b": uinit(ks[1], (c_out,), c_in),
        "l1_w":   uinit(ks[2], (hidden, c_out * P), c_out * P),  # Linear (out,in)
        "l1_b":   uinit(ks[3], (hidden,), c_out * P),
        "cls_w":  uinit(ks[4], (class_size, hidden), hidden),
        "cls_b":  uinit(ks[5], (class_size,), hidden),
        "reg_w":  uinit(ks[6], (reg_size, hidden), hidden),
        "reg_b":  uinit(ks[7], (reg_size,), hidden),
    }


# ---------------------------------------------------------------------------
# One-time weight layout plumbing (hoisted out of the forward path)
# ---------------------------------------------------------------------------
def prepare_params(params, map_size, *, hid_pad=HID_PAD, out_pad=OUT_PAD,
                   mm_dtype=jnp.bfloat16):
    P = map_size * map_size
    conv_w = params["conv_w"].astype(jnp.float32)                # (c_out, c_in)
    c_out, c_in = conv_w.shape
    TP = _pos_tile(c_in, c_out)
    P_pad = -(-P // TP) * TP

    # Per-position-block 1x1-conv weight (block-diagonal over only the TP
    # positions of ONE grid step — TP x the dense size, not P x):
    #   wc[p*c_in + ci, q*c_out + co] = conv_w[co, ci] * (p == q)
    eye = jnp.eye(TP, dtype=jnp.float32)
    wc = jnp.einsum("oc,pq->pcqo", conv_w, eye).reshape(TP * c_in, TP * c_out)
    bc = jnp.tile(params["conv_b"], TP).reshape(1, TP * c_out)   # bc[q*c_out+co]=conv_b[co]

    # l1 weight with PyTorch's channel-major flatten permutation folded in:
    #   w1p[p*c_out + co, n] = l1_w[n, co*P + p]
    # zero rows for padded positions, zero cols for padded hidden lanes.
    l1_w = params["l1_w"].astype(jnp.float32)                    # (hidden, c_out*P)
    hidden = l1_w.shape[0]
    assert l1_w.shape[1] == c_out * P
    assert hidden <= hid_pad
    w1_pcn = l1_w.reshape(hidden, c_out, P).transpose(2, 1, 0).reshape(P * c_out, hidden)
    w1p = jnp.zeros((P_pad * c_out, hid_pad), jnp.float32)
    w1p = w1p.at[:P * c_out, :hidden].set(w1_pcn)
    b1 = jnp.zeros((1, hid_pad), jnp.float32).at[0, :hidden].set(params["l1_b"])

    # Merged classifier|regressor head, zero-padded to (hid_pad, out_pad)
    # -> unmasked lane-dense output stores; wrapper slices the heads apart.
    cls_w, reg_w = params["cls_w"], params["reg_w"]
    class_size, reg_size = cls_w.shape[0], reg_w.shape[0]
    assert class_size + reg_size <= out_pad
    wh = (jnp.zeros((hid_pad, out_pad), jnp.float32)
          .at[:hidden, :class_size].set(cls_w.T)
          .at[:hidden, class_size:class_size + reg_size].set(reg_w.T))
    bh = (jnp.zeros((1, out_pad), jnp.float32)
          .at[0, :class_size].set(params["cls_b"])
          .at[0, class_size:class_size + reg_size].set(params["reg_b"]))

    return {"wc": wc.astype(mm_dtype), "bc": bc,                 # biases stay f32
            "w1": w1p.astype(mm_dtype), "b1": b1,
            "wh": wh.astype(mm_dtype), "bh": bh}


# ---------------------------------------------------------------------------
# Forward wrapper
# ---------------------------------------------------------------------------
def coords_net_forward(x_nchw, prepped, *, padding_size, pool_k, pool_s,
                       class_size, reg_size, batch_tile=256):
    assert pool_k == pool_s, "kernel specialized for non-overlapping pooling"
    p_l, p_r, p_t, p_b = padding_size
    B, C, H, W = x_nchw.shape

    wc, bc = prepped["wc"], prepped["bc"]
    w1, b1 = prepped["w1"], prepped["b1"]
    wh, bh = prepped["wh"], prepped["bh"]
    assert wc.shape[0] % C == 0
    TP = wc.shape[0] // C                         # positions per grid step
    c_out = wc.shape[1] // TP
    P_pad = w1.shape[0] // c_out
    hid_pad, out_pad = w1.shape[1], wh.shape[1]

    # Replication padding only copies values, so it commutes with the
    # elementwise SiLU that precedes it in the module: pad here (layout glue),
    # SiLU runs inside the kernel.
    xp = jnp.pad(x_nchw, ((0, 0), (0, 0), (p_t, p_b), (p_l, p_r)), mode="edge")
    Hp, Wp = H + p_t + p_b, W + p_l + p_r
    Ho, Wo = (Hp - pool_k) // pool_s + 1, (Wp - pool_k) // pool_s + 1
    P = Ho * Wo
    n_taps = pool_k * pool_k
    assert P <= P_pad and P_pad % TP == 0

    # Batch tiling: the whole (small) batch in one step, else TM-row tiles.
    # TM=128 already saturates the MXU M dim on v5e; 256 suits v6e/v7x.
    if B <= batch_tile:
        TM, B_pad = B, B
    else:
        TM = batch_tile
        B_pad = -(-B // TM) * TM

    # Pack the pooling-window taps into one lane-dense bf16 slab:
    #   taps[b, a*k + bb, (ph*Wo + pw)*C + ci] = xp[b, ci, ph*s + a, pw*s + bb]
    # bf16 halves the only per-step activation stream into the kernel.
    # TODO(synk): this relayout is still one extra HBM round-trip of the
    # activation; at production batch sizes feed NHWC (packing degenerates to
    # reshapes) or move the window slicing in-kernel.
    xt = jnp.transpose(xp[:, :, :Ho * pool_s, :Wo * pool_s], (0, 2, 3, 1))
    xw = xt.reshape(B, Ho, pool_k, Wo, pool_k, C)
    taps = jnp.transpose(xw, (0, 2, 4, 1, 3, 5)).reshape(B, n_taps, P * C)
    taps = jnp.pad(taps, ((0, B_pad - B), (0, 0), (0, (P_pad - P) * C)))
    taps = taps.astype(jnp.bfloat16)

    grid = (B_pad // TM, P_pad // TP)             # (batch tiles, position blocks)
    resident = pl.Buffered(1)                     # grid-invariant weights: 1 buffer

    out = pl.pallas_call(
        coords_net_kernel,
        out_shape=jax.ShapeDtypeStruct((B_pad, out_pad), jnp.float32),
        grid=grid,
        in_specs=[
            pl.BlockSpec((TM, n_taps, TP * C), lambda b, k: (b, 0, k)),
            pl.BlockSpec(wc.shape, lambda b, k: (0, 0), pipeline_mode=resident),
            pl.BlockSpec(bc.shape, lambda b, k: (0, 0), pipeline_mode=resident),
            pl.BlockSpec((TP * c_out, hid_pad), lambda b, k: (k, 0)),
            pl.BlockSpec(b1.shape, lambda b, k: (0, 0), pipeline_mode=resident),
            pl.BlockSpec(wh.shape, lambda b, k: (0, 0), pipeline_mode=resident),
            pl.BlockSpec(bh.shape, lambda b, k: (0, 0), pipeline_mode=resident),
        ],
        out_specs=pl.BlockSpec((TM, out_pad), lambda b, k: (b, 0)),
        scratch_shapes=[pltpu.VMEM((TM, hid_pad), jnp.float32)],
        compiler_params=pltpu.CompilerParams(
            dimension_semantics=("parallel", "arbitrary"),  # batch || , positions = reduction
            vmem_limit_bytes=32 * 1024 * 1024,  # ample headroom: demo tiles use ~2 MB
        ),
    )(taps, wc, bc, w1, b1, wh, bh)

    out = out[:B]
    return out[:, :class_size], out[:, class_size:class_size + reg_size]


# ---------------------------------------------------------------------------
# Pure-JAX reference (PyTorch-faithful) for a numerical sanity check
# ---------------------------------------------------------------------------
def coords_net_reference(x, params, padding_size, pool_k, pool_s):
    silu = lambda v: v * (1.0 / (1.0 + jnp.exp(-v)))
    p_l, p_r, p_t, p_b = padding_size
    out = jnp.pad(silu(x), ((0, 0), (0, 0), (p_t, p_b), (p_l, p_r)), mode="edge")
    B, C, Hp, Wp = out.shape
    Ho, Wo = (Hp - pool_k) // pool_s + 1, (Wp - pool_k) // pool_s + 1
    out = out[:, :, :Ho * pool_s, :Wo * pool_s].reshape(B, C, Ho, pool_k, Wo, pool_k)
    out = out.max(axis=(3, 5))                                       # (B, C, Ho, Wo)
    out = jnp.einsum("bchw,oc->bohw", out, params["conv_w"]) \
        + params["conv_b"][None, :, None, None]
    out = silu(out).reshape(B, -1)                                   # channel-major flatten
    h = silu(out @ params["l1_w"].T + params["l1_b"])
    return (h @ params["cls_w"].T + params["cls_b"],
            h @ params["reg_w"].T + params["reg_b"])


if __name__ == "__main__":
    # Small, self-consistent configuration:
    #   input 16x16, ReplicationPad2d((1,1,1,1)) -> 18x18,
    #   MaxPool2d(2,2) -> 9x9  => map_size = 9
    B, c_in, H, W = 2, 16, 16, 16
    c_out, hidden, class_size, reg_size = 8, 32, 5, 10
    padding_size = (1, 1, 1, 1)
    pool_k = pool_s = 2
    map_size = (H + padding_size[2] + padding_size[3] - pool_k) // pool_s + 1  # 9

    key = jax.random.PRNGKey(0)
    k_x, k_p = jax.random.split(key)
    x = jax.random.normal(k_x, (B, c_in, H, W), jnp.float32)
    params = init_params(k_p, c_in, c_out, map_size, hidden, class_size, reg_size)

    prepped = prepare_params(params, map_size)            # one-time weight prep
    fwd = jax.jit(functools.partial(
        coords_net_forward, padding_size=padding_size, pool_k=pool_k,
        pool_s=pool_s, class_size=class_size, reg_size=reg_size))

    cls_out, reg_out = fwd(x, prepped)
    jax.block_until_ready((cls_out, reg_out))

    assert cls_out.shape == (B, class_size) and cls_out.dtype == jnp.float32
    assert reg_out.shape == (B, reg_size) and reg_out.dtype == jnp.float32

    # Numerical sanity check (loose tolerance: bf16 MXU operands + bf16 taps).
    cls_ref, reg_ref = coords_net_reference(x, params, padding_size, pool_k, pool_s)
    err = max(float(jnp.max(jnp.abs(cls_out - cls_ref))),
              float(jnp.max(jnp.abs(reg_out - reg_ref))))
    assert err < 1e-1, f"mismatch vs reference: max abs err = {err}"

    print("KERNEL_OK")
</pallas_src>

<mosaic_0001>
module attributes {stable_mosaic.version = 11 : i64} {
  func.func @coords_net_kernel(%arg0: i32, %arg1: i32, %arg2: memref<2x4x256xbf16, #tpu.memory_space<vmem>>, %arg3: memref<256x128xbf16, #tpu.memory_space<vmem>>, %arg4: memref<1x128xf32, #tpu.memory_space<vmem>>, %arg5: memref<128x128xbf16, #tpu.memory_space<vmem>>, %arg6: memref<1x128xf32, #tpu.memory_space<vmem>>, %arg7: memref<128x128xbf16, #tpu.memory_space<vmem>>, %arg8: memref<1x128xf32, #tpu.memory_space<vmem>>, %arg9: memref<2x128xf32, #tpu.memory_space<vmem>>, %arg10: memref<2x128xf32, #tpu.memory_space<vmem>>) attributes {dimension_semantics = [#tpu.dimension_semantics<parallel>, #tpu.dimension_semantics<arbitrary>], iteration_bounds = array<i64: 1, 6>, scalar_prefetch = 0 : i64, scratch_operands = 1 : i64, tpu.core_type = #tpu.core_type<tc>, window_params = [{transform_indices = @transform_0, window_bounds = array<i64: 2, 4, 256>}, {pipeline_mode = #tpu.pipeline_mode<synchronous>, transform_indices = @transform_1, window_bounds = array<i64: 256, 128>}, {pipeline_mode = #tpu.pipeline_mode<synchronous>, transform_indices = @transform_2, window_bounds = array<i64: 1, 128>}, {transform_indices = @transform_3, window_bounds = array<i64: 128, 128>}, {pipeline_mode = #tpu.pipeline_mode<synchronous>, transform_indices = @transform_4, window_bounds = array<i64: 1, 128>}, {pipeline_mode = #tpu.pipeline_mode<synchronous>, transform_indices = @transform_5, window_bounds = array<i64: 128, 128>}, {pipeline_mode = #tpu.pipeline_mode<synchronous>, transform_indices = @transform_6, window_bounds = array<i64: 1, 128>}, {transform_indices = @transform_7, window_bounds = array<i64: 2, 128>}]} {
    %c0_i32 = arith.constant 0 : i32
    %0 = arith.cmpi eq, %arg1, %c0_i32 : i32
    %1 = arith.extui %0 : i1 to i32
    %c0_i32_0 = arith.constant 0 : i32
    %2 = arith.cmpi ne, %1, %c0_i32_0 : i32
    scf.if %2 {
      %cst_30 = arith.constant 0.000000e+00 : f32
      %71 = vector.broadcast %cst_30 : f32 to vector<2x128xf32>
      %c0_31 = arith.constant 0 : index
      %c0_32 = arith.constant 0 : index
      %72 = vector.load %arg10[%c0_31, %c0_32] : memref<2x128xf32, #tpu.memory_space<vmem>>, vector<2x128xf32>
      tpu.vector_store %arg10[%c0_31, %c0_32], %71 {strides = array<i32>} : memref<2x128xf32, #tpu.memory_space<vmem>>, vector<2x128xf32>,
    } else {
    }
    %c0 = arith.constant 0 : index
    %c0_1 = arith.constant 0 : index
    %c0_2 = arith.constant 0 : index
    %3 = vector.load %arg2[%c0, %c0_1, %c0_2] : memref<2x4x256xbf16, #tpu.memory_space<vmem>>, vector<2x4x256xbf16>
    %4 = arith.extf %3 : vector<2x4x256xbf16> to vector<2x4x256xf32>
    %5 = vector.extract_strided_slice %4 {offsets = [0, 0, 0], sizes = [2, 1, 256], strides = [1, 1, 1]} : vector<2x4x256xf32> to vector<2x1x256xf32>
    %6 = vector.shape_cast %5 : vector<2x1x256xf32> to vector<2x256xf32>
    %cst = arith.constant 5.000000e-01 : f32
    %7 = vector.broadcast %cst : f32 to vector<2x256xf32>
    %8 = arith.mulf %7, %6 : vector<2x256xf32>
    %cst_3 = arith.constant 5.000000e-01 : f32
    %9 = vector.broadcast %cst_3 : f32 to vector<2x256xf32>
    %10 = arith.mulf %9, %6 : vector<2x256xf32>
    %11 = math.tanh %10 : vector<2x256xf32>
    %cst_4 = arith.constant 1.000000e+00 : f32
    %12 = vector.broadcast %cst_4 : f32 to vector<2x256xf32>
    %13 = arith.addf %12, %11 : vector<2x256xf32>
    %14 = arith.mulf %8, %13 : vector<2x256xf32>
    %15 = vector.extract_strided_slice %4 {offsets = [0, 1, 0], sizes = [2, 1, 256], strides = [1, 1, 1]} : vector<2x4x256xf32> to vector<2x1x256xf32>
    %16 = vector.shape_cast %15 : vector<2x1x256xf32> to vector<2x256xf32>
    %cst_5 = arith.constant 5.000000e-01 : f32
    %17 = vector.broadcast %cst_5 : f32 to vector<2x256xf32>
    %18 = arith.mulf %17, %16 : vector<2x256xf32>
    %cst_6 = arith.constant 5.000000e-01 : f32
    %19 = vector.broadcast %cst_6 : f32 to vector<2x256xf32>
    %20 = arith.mulf %19, %16 : vector<2x256xf32>
    %21 = math.tanh %20 : vector<2x256xf32>
    %cst_7 = arith.constant 1.000000e+00 : f32
    %22 = vector.broadcast %cst_7 : f32 to vector<2x256xf32>
    %23 = arith.addf %22, %21 : vector<2x256xf32>
    %24 = arith.mulf %18, %23 : vector<2x256xf32>
    %25 = arith.maximumf %14, %24 : vector<2x256xf32>
    %26 = vector.extract_strided_slice %4 {offsets = [0, 2, 0], sizes = [2, 1, 256], strides = [1, 1, 1]} : vector<2x4x256xf32> to vector<2x1x256xf32>
    %27 = vector.shape_cast %26 : vector<2x1x256xf32> to vector<2x256xf32>
    %cst_8 = arith.constant 5.000000e-01 : f32
    %28 = vector.broadcast %cst_8 : f32 to vector<2x256xf32>
    %29 = arith.mulf %28, %27 : vector<2x256xf32>
    %cst_9 = arith.constant 5.000000e-01 : f32
    %30 = vector.broadcast %cst_9 : f32 to vector<2x256xf32>
    %31 = arith.mulf %30, %27 : vector<2x256xf32>
    %32 = math.tanh %31 : vector<2x256xf32>
    %cst_10 = arith.constant 1.000000e+00 : f32
    %33 = vector.broadcast %cst_10 : f32 to vector<2x256xf32>
    %34 = arith.addf %33, %32 : vector<2x256xf32>
    %35 = arith.mulf %29, %34 : vector<2x256xf32>
    %36 = arith.maximumf %25, %35 : vector<2x256xf32>
    %37 = vector.extract_strided_slice %4 {offsets = [0, 3, 0], sizes = [2, 1, 256], strides = [1, 1, 1]} : vector<2x4x256xf32> to vector<2x1x256xf32>
    %38 = vector.shape_cast %37 : vector<2x1x256xf32> to vector<2x256xf32>
    %cst_11 = arith.constant 5.000000e-01 : f32
    %39 = vector.broadcast %cst_11 : f32 to vector<2x256xf32>
    %40 = arith.mulf %39, %38 : vector<2x256xf32>
    %cst_12 = arith.constant 5.000000e-01 : f32
    %41 = vector.broadcast %cst_12 : f32 to vector<2x256xf32>
    %42 = arith.mulf %41, %38 : vector<2x256xf32>
    %43 = math.tanh %42 : vector<2x256xf32>
    %cst_13 = arith.constant 1.000000e+00 : f32
    %44 = vector.broadcast %cst_13 : f32 to vector<2x256xf32>
    %45 = arith.addf %44, %43 : vector<2x256xf32>
    %46 = arith.mulf %40, %45 : vector<2x256xf32>
    %47 = arith.maximumf %36, %46 : vector<2x256xf32>
    %48 = arith.truncf %47 : vector<2x256xf32> to vector<2x256xbf16>
    %c0_14 = arith.constant 0 : index
    %c0_15 = arith.constant 0 : index
    %49 = vector.load %arg3[%c0_14, %c0_15] : memref<256x128xbf16, #tpu.memory_space<vmem>>, vector<256x128xbf16>
    %cst_16 = arith.constant dense<0.000000e+00> : vector<2x128xf32>
    %50 = tpu.matmul %48, %49, %cst_16 {dimension_numbers = #tpu.dot_dimension_numbers<[1], [0], [0], [1], [0, 0, 1, 1], [], []>} : vector<2x256xbf16>, vector<256x128xbf16>, vector<2x128xf32> -> vector<2x128xf32>
    %c0_17 = arith.constant 0 : index
    %c0_18 = arith.constant 0 : index
    %51 = vector.load %arg4[%c0_17, %c0_18] : memref<1x128xf32, #tpu.memory_space<vmem>>, vector<1x128xf32>
    %52 = vector.broadcast %51 : vector<1x128xf32> to vector<2x128xf32>
    %53 = arith.addf %50, %52 : vector<2x128xf32>
    %cst_19 = arith.constant 5.000000e-01 : f32
    %54 = vector.broadcast %cst_19 : f32 to vector<2x128xf32>
    %55 = arith.mulf %54, %53 : vector<2x128xf32>
    %cst_20 = arith.constant 5.000000e-01 : f32
    %56 = vector.broadcast %cst_20 : f32 to vector<2x128xf32>
    %57 = arith.mulf %56, %53 : vector<2x128xf32>
    %58 = math.tanh %57 : vector<2x128xf32>
    %cst_21 = arith.constant 1.000000e+00 : f32
    %59 = vector.broadcast %cst_21 : f32 to vector<2x128xf32>
    %60 = arith.addf %59, %58 : vector<2x128xf32>
    %61 = arith.mulf %55, %60 : vector<2x128xf32>
    %c0_22 = arith.constant 0 : index
    %c0_23 = arith.constant 0 : index
    %62 = vector.load %arg10[%c0_22, %c0_23] : memref<2x128xf32, #tpu.memory_space<vmem>>, vector<2x128xf32>
    %63 = arith.truncf %61 : vector<2x128xf32> to vector<2x128xbf16>
    %c0_24 = arith.constant 0 : index
    %c0_25 = arith.constant 0 : index
    %64 = vector.load %arg5[%c0_24, %c0_25] : memref<128x128xbf16, #tpu.memory_space<vmem>>, vector<128x128xbf16>
    %cst_26 = arith.constant dense<0.000000e+00> : vector<2x128xf32>
    %65 = tpu.matmul %63, %64, %cst_26 {dimension_numbers = #tpu.dot_dimension_numbers<[1], [0], [0], [1], [0, 0, 1, 1], [], []>} : vector<2x128xbf16>, vector<128x128xbf16>, vector<2x128xf32> -> vector<2x128xf32>
    %66 = arith.addf %62, %65 : vector<2x128xf32>
    %c0_27 = arith.constant 0 : index
    %c0_28 = arith.constant 0 : index
    %67 = vector.load %arg10[%c0_27, %c0_28] : memref<2x128xf32, #tpu.memory_space<vmem>>, vector<2x128xf32>
    tpu.vector_store %arg10[%c0_27, %c0_28], %66 {strides = array<i32>} : memref<2x128xf32, #tpu.memory_space<vmem>>, vector<2x128xf32>,
    %c5_i32 = arith.constant 5 : i32
    %68 = arith.cmpi eq, %arg1, %c5_i32 : i32
    %69 = arith.extui %68 : i1 to i32
    %c0_i32_29 = arith.constant 0 : i32
    %70 = arith.cmpi ne, %69, %c0_i32_29 : i32
    scf.if %70 {
      %c0_30 = arith.constant 0 : index
      %c0_31 = arith.constant 0 : index
      %71 = vector.load %arg10[%c0_30, %c0_31] : memref<2x128xf32, #tpu.memory_space<vmem>>, vector<2x128xf32>
      %c0_32 = arith.constant 0 : index
      %c0_33 = arith.constant 0 : index
      %72 = vector.load %arg6[%c0_32, %c0_33] : memref<1x128xf32, #tpu.memory_space<vmem>>, vector<1x128xf32>
      %73 = vector.broadcast %72 : vector<1x128xf32> to vector<2x128xf32>
      %74 = arith.addf %71, %73 : vector<2x128xf32>
      %cst_34 = arith.constant 5.000000e-01 : f32
      %75 = vector.broadcast %cst_34 : f32 to vector<2x128xf32>
      %76 = arith.mulf %75, %74 : vector<2x128xf32>
      %cst_35 = arith.constant 5.000000e-01 : f32
      %77 = vector.broadcast %cst_35 : f32 to vector<2x128xf32>
      %78 = arith.mulf %77, %74 : vector<2x128xf32>
      %79 = math.tanh %78 : vector<2x128xf32>
      %cst_36 = arith.constant 1.000000e+00 : f32
      %80 = vector.broadcast %cst_36 : f32 to vector<2x128xf32>
      %81 = arith.addf %80, %79 : vector<2x128xf32>
      %82 = arith.mulf %76, %81 : vector<2x128xf32>
      %83 = arith.truncf %82 : vector<2x128xf32> to vector<2x128xbf16>
      %c0_37 = arith.constant 0 : index
      %c0_38 = arith.constant 0 : index
      %84 = vector.load %arg7[%c0_37, %c0_38] : memref<128x128xbf16, #tpu.memory_space<vmem>>, vector<128x128xbf16>
      %cst_39 = arith.constant dense<0.000000e+00> : vector<2x128xf32>
      %85 = tpu.matmul %83, %84, %cst_39 {dimension_numbers = #tpu.dot_dimension_numbers<[1], [0], [0], [1], [0, 0, 1, 1], [], []>} : vector<2x128xbf16>, vector<128x128xbf16>, vector<2x128xf32> -> vector<2x128xf32>
      %c0_40 = arith.constant 0 : index
      %c0_41 = arith.constant 0 : index
      %86 = vector.load %arg8[%c0_40, %c0_41] : memref<1x128xf32, #tpu.memory_space<vmem>>, vector<1x128xf32>
      %87 = vector.broadcast %86 : vector<1x128xf32> to vector<2x128xf32>
      %88 = arith.addf %85, %87 : vector<2x128xf32>
      %c0_42 = arith.constant 0 : index
      %c0_43 = arith.constant 0 : index
      %89 = vector.load %arg9[%c0_42, %c0_43] : memref<2x128xf32, #tpu.memory_space<vmem>>, vector<2x128xf32>
      tpu.vector_store %arg9[%c0_42, %c0_43], %88 {strides = array<i32>} : memref<2x128xf32, #tpu.memory_space<vmem>>, vector<2x128xf32>,
    } else {
    }
    return
  }
  func.func @transform_0(%arg0: i32, %arg1: i32) -> (i32, i32, i32) {
    %c0_i32 = arith.constant 0 : i32
    %c0_i32_0 = arith.constant 0 : i32
    return %arg0, %c0_i32, %arg1 : i32, i32, i32
  }
  func.func @transform_1(%arg0: i32, %arg1: i32) -> (i32, i32) {
    %c0_i32 = arith.constant 0 : i32
    %c0_i32_0 = arith.constant 0 : i32
    %c0_i32_1 = arith.constant 0 : i32
    return %c0_i32, %c0_i32_0 : i32, i32
  }
  func.func @transform_2(%arg0: i32, %arg1: i32) -> (i32, i32) {
    %c0_i32 = arith.constant 0 : i32
    %c0_i32_0 = arith.constant 0 : i32
    %c0_i32_1 = arith.constant 0 : i32
    return %c0_i32, %c0_i32_0 : i32, i32
  }
  func.func @transform_3(%arg0: i32, %arg1: i32) -> (i32, i32) {
    %c0_i32 = arith.constant 0 : i32
    %c0_i32_0 = arith.constant 0 : i32
    return %arg1, %c0_i32 : i32, i32
  }
  func.func @transform_4(%arg0: i32, %arg1: i32) -> (i32, i32) {
    %c0_i32 = arith.constant 0 : i32
    %c0_i32_0 = arith.constant 0 : i32
    %c0_i32_1 = arith.constant 0 : i32
    return %c0_i32, %c0_i32_0 : i32, i32
  }
  func.func @transform_5(%arg0: i32, %arg1: i32) -> (i32, i32) {
    %c0_i32 = arith.constant 0 : i32
    %c0_i32_0 = arith.constant 0 : i32
    %c0_i32_1 = arith.constant 0 : i32
    return %c0_i32, %c0_i32_0 : i32, i32
  }
  func.func @transform_6(%arg0: i32, %arg1: i32) -> (i32, i32) {
    %c0_i32 = arith.constant 0 : i32
    %c0_i32_0 = arith.constant 0 : i32
    %c0_i32_1 = arith.constant 0 : i32
    return %c0_i32, %c0_i32_0 : i32, i32
  }
  func.func @transform_7(%arg0: i32, %arg1: i32) -> (i32, i32) {
    %c0_i32 = arith.constant 0 : i32
    %c0_i32_0 = arith.constant 0 : i32
    return %arg0, %c0_i32 : i32, i32
  }
}

</mosaic_0001>

<llo_original>
// kernel: coords_net_forward.1
$region0: #{coords_net_forward.1}
  #allocation0 [shape = 'u32[]', space=smem, size = 0x4, offset = 0x4, fixed_abs, tag = 'smem constant byte address 0x4 - core index']
  #allocation1 [shape = 'u32[144,128]{1,0:T(1,128)}', space=vmem, size = 0x12000, scoped, tag = 'internal scratch']
  #allocation2 [shape = 'f32[2,128]{1,0:T(2,128)}', space=vmem, size = 0x400, scoped, tag = 'scratch operand']
  %s0 = inlined_call_operand.vmem [shape: bf16[2,4,1536], index: 0, kind: input, shape index: {}]
  %s1 = inlined_call_operand.vmem [shape: bf16[256,128], index: 1, kind: input, shape index: {}]
  %s2 = inlined_call_operand.vmem [shape: f32[1,128], index: 2, kind: input, shape index: {}]
  %s3 = inlined_call_operand.vmem [shape: bf16[768,128], index: 3, kind: input, shape index: {}]
  %s4 = inlined_call_operand.vmem [shape: f32[1,128], index: 4, kind: input, shape index: {}]
  %s5 = inlined_call_operand.vmem [shape: bf16[128,128], index: 5, kind: input, shape index: {}]
  %s6 = inlined_call_operand.vmem [shape: f32[1,128], index: 6, kind: input, shape index: {}]
  %s7 = inlined_call_operand.vmem [shape: f32[2,128], index: 7, kind: output, shape index: {}]
  %s8 = sld [smem:[#allocation0]]
  $region110: #{coords_net_forward.1} parent=0
    _
  %s10 = ssub.s32 1, %s8
  %s11 = scalar_select 0, %s10, %s8
  $region1: #{coords_net_forward.1} parent=0
    #allocation3 [shape = 'u8[8192]{0}', space=vmem, size = 0x2000, scoped, tag = 'input window, operand 0']
    loop: start=0, step=1, limit=8
    $region2: #{coords_net_forward.1} parent=1 // loop_pre_header
      _
    $region3: #{coords_net_forward.1} parent=1 // loop_header
      %s13 = sphi 0, %s17
      %p14 = scmp.ge.s32.totalorder %s13, 8
      %s20 = sphi 0, %s32
      %s21 = sphi 0, %s28
      %s22 = sphi 0, %s20
      %s23 = sphi 0, %s21
      %s24 = sphi 0, %s22
      %s25 = sphi 0, %s23
      %s37 = sphi 0, %s39
      %s40 = sphi 0, %s37
      %s41 = sphi 0, %s40
      %s57 = sphi 0, %s41
      %s61 = sphi 0, %s61
      %s63 = sphi 0, %s61
      %s64 = sphi 0, %s63
      %s78 = sphi 0, %s64
      %s82 = sphi 0, %s82
      %s84 = sphi 0, %s82
      %s85 = sphi 0, %s84
      %s99 = sphi 0, %s85
      %s105 = sphi 0, %s107
      %s108 = sphi 0, %s105
      %s109 = sphi 0, %s108
      %s125 = sphi 0, %s109
      %s129 = sphi 0, %s129
      %s131 = sphi 0, %s129
      %s132 = sphi 0, %s131
      %s146 = sphi 0, %s132
      %s150 = sphi 0, %s150
      %s152 = sphi 0, %s150
      %s153 = sphi 0, %s152
      %s167 = sphi 0, %s153
      %s171 = sphi 0, %s171
      %s173 = sphi 0, %s171
      %s174 = sphi 0, %s173
      %s188 = sphi 0, %s174
      %s194 = sphi 0, %s196
      %s197 = sphi 0, %s194
      %s198 = sphi 0, %s197
      %s214 = sphi 0, %s198
    $region4: #{coords_net_forward.1} parent=1 // loop_header_branch
      %16 = sbr.rel (%p14) target = $region8
    $region5: #{coords_net_forward.1} parent=1 // loop_body
      %s18 = ssub.s32 %s13, 1
      %s19 = ssub.s32 %s13, 2
      %s26 = sadd.s32 1, %s21
      %p27 = scmp.ge.s32.totalorder %s26, 6
      %s28 = scalar_select %p27, 0, %s26
      %s29 = sadd.s32 1, %s20
      %s30 = scalar_select %p27, %s29, %s20
      %p31 = scmp.ge.s32.totalorder %s30, 1
      %s32 = scalar_select %p31, 0, %s30
      %s33 = ssub.s32 %s20, %s32
      %s34 = ssub.s32 %s21, %s28
      %s35 = sor.u32 %s33, %s34
      %p36 = scmp.eq.s32.totalorder %s35, 0
      %s38 = sadd.s32 %s37, 1
      %s39 = scalar_select %p36, %s37, %s38
      %p42 = pneg %p36
      %p43 = scmp.eq.s32.totalorder %s13, 5
      %p44 = por %p42, %p43
      %p45 = scmp.ne.s32.totalorder %s37, %s40
      %p46 = scmp.eq.s32.totalorder %s13, 0
      %p47 = por %p45, %p46
      %p48 = scmp.ne.s32.totalorder %s37, %s40
      %p49 = scmp.eq.s32.totalorder %s18, 5
      %p50 = por %p48, %p49
      %p51 = scmp.ne.s32.totalorder %s40, %s41
      %p52 = scmp.eq.s32.totalorder %s18, 0
      %p53 = por %p51, %p52
      %p54 = scmp.ne.s32.totalorder %s40, %s41
      %p55 = scmp.eq.s32.totalorder %s19, 5
      %p56 = por %p54, %p55
      %p58 = scmp.ne.s32.totalorder %s41, %s57
      %p59 = scmp.eq.s32.totalorder %s19, 0
      %p60 = por %p58, %p59
      %s62 = sadd.s32 %s61, 1
      %p65 = scmp.eq.s32.totalorder %s13, 5
      %p66 = scmp.ne.s32.totalorder %s61, %s63
      %p67 = scmp.eq.s32.totalorder %s13, 0
      %p68 = por %p66, %p67
      %p69 = scmp.ne.s32.totalorder %s61, %s63
      %p70 = scmp.eq.s32.totalorder %s18, 5
      %p71 = por %p69, %p70
      %p72 = scmp.ne.s32.totalorder %s63, %s64
      %p73 = scmp.eq.s32.totalorder %s18, 0
      %p74 = por %p72, %p73
      %p75 = scmp.ne.s32.totalorder %s63, %s64
      %p76 = scmp.eq.s32.totalorder %s19, 5
      %p77 = por %p75, %p76
      %p79 = scmp.ne.s32.totalorder %s64, %s78
      %p80 = scmp.eq.s32.totalorder %s19, 0
      %p81 = por %p79, %p80
      %s83 = sadd.s32 %s82, 1
      %p86 = scmp.eq.s32.totalorder %s13, 5
      %p87 = scmp.ne.s32.totalorder %s82, %s84
      %p88 = scmp.eq.s32.totalorder %s13, 0
      %p89 = por %p87, %p88
      %p90 = scmp.ne.s32.totalorder %s82, %s84
      %p91 = scmp.eq.s32.totalorder %s18, 5
      %p92 = por %p90, %p91
      %p93 = scmp.ne.s32.totalorder %s84, %s85
      %p94 = scmp.eq.s32.totalorder %s18, 0
      %p95 = por %p93, %p94
      %p96 = scmp.ne.s32.totalorder %s84, %s85
      %p97 = scmp.eq.s32.totalorder %s19, 5
      %p98 = por %p96, %p97
      %p100 = scmp.ne.s32.totalorder %s85, %s99
      %p101 = scmp.eq.s32.totalorder %s19, 0
      %p102 = por %p100, %p101
      %s103 = ssub.s32 %s21, %s28
      %p104 = scmp.eq.s32.totalorder %s103, 0
      %s106 = sadd.s32 %s105, 1
      %s107 = scalar_select %p104, %s105, %s106
      %p110 = pneg %p104
      %p111 = scmp.eq.s32.totalorder %s13, 5
      %p112 = por %p110, %p111
      %p113 = scmp.ne.s32.totalorder %s105, %s108
      %p114 = scmp.eq.s32.totalorder %s13, 0
      %p115 = por %p113, %p114
      %p116 = scmp.ne.s32.totalorder %s105, %s108
      %p117 = scmp.eq.s32.totalorder %s18, 5
      %p118 = por %p116, %p117
      %p119 = scmp.ne.s32.totalorder %s108, %s109
      %p120 = scmp.eq.s32.totalorder %s18, 0
      %p121 = por %p119, %p120
      %p122 = scmp.ne.s32.totalorder %s108, %s109
      %p123 = scmp.eq.s32.totalorder %s19, 5
      %p124 = por %p122, %p123
      %p126 = scmp.ne.s32.totalorder %s109, %s125
      %p127 = scmp.eq.s32.totalorder %s19, 0
      %p128 = por %p126, %p127
      %s130 = sadd.s32 %s129, 1
      %p133 = scmp.eq.s32.totalorder %s13, 5
      %p134 = scmp.ne.s32.totalorder %s129, %s131
      %p135 = scmp.eq.s32.totalorder %s13, 0
      %p136 = por %p134, %p135
      %p137 = scmp.ne.s32.totalorder %s129, %s131
      %p138 = scmp.eq.s32.totalorder %s18, 5
      %p139 = por %p137, %p138
      %p140 = scmp.ne.s32.totalorder %s131, %s132
      %p141 = scmp.eq.s32.totalorder %s18, 0
      %p142 = por %p140, %p141
      %p143 = scmp.ne.s32.totalorder %s131, %s132
      %p144 = scmp.eq.s32.totalorder %s19, 5
      %p145 = por %p143, %p144
      %p147 = scmp.ne.s32.totalorder %s132, %s146
      %p148 = scmp.eq.s32.totalorder %s19, 0
      %p149 = por %p147, %p148
      %s151 = sadd.s32 %s150, 1
      %p154 = scmp.eq.s32.totalorder %s13, 5
      %p155 = scmp.ne.s32.totalorder %s150, %s152
      %p156 = scmp.eq.s32.totalorder %s13, 0
      %p157 = por %p155, %p156
      %p158 = scmp.ne.s32.totalorder %s150, %s152
      %p159 = scmp.eq.s32.totalorder %s18, 5
      %p160 = por %p158, %p159
      %p161 = scmp.ne.s32.totalorder %s152, %s153
      %p162 = scmp.eq.s32.totalorder %s18, 0
      %p163 = por %p161, %p162
      %p164 = scmp.ne.s32.totalorder %s152, %s153
      %p165 = scmp.eq.s32.totalorder %s19, 5
      %p166 = por %p164, %p165
      %p168 = scmp.ne.s32.totalorder %s153, %s167
      %p169 = scmp.eq.s32.totalorder %s19, 0
      %p170 = por %p168, %p169
      %s172 = sadd.s32 %s171, 1
      %p175 = scmp.eq.s32.totalorder %s13, 5
      %p176 = scmp.ne.s32.totalorder %s171, %s173
      %p177 = scmp.eq.s32.totalorder %s13, 0
      %p178 = por %p176, %p177
      %p179 = scmp.ne.s32.totalorder %s171, %s173
      %p180 = scmp.eq.s32.totalorder %s18, 5
      %p181 = por %p179, %p180
      %p182 = scmp.ne.s32.totalorder %s173, %s174
      %p183 = scmp.eq.s32.totalorder %s18, 0
      %p184 = por %p182, %p183
      %p185 = scmp.ne.s32.totalorder %s173, %s174
      %p186 = scmp.eq.s32.totalorder %s19, 5
      %p187 = por %p185, %p186
      %p189 = scmp.ne.s32.totalorder %s174, %s188
      %p190 = scmp.eq.s32.totalorder %s19, 0
      %p191 = por %p189, %p190
      %s192 = ssub.s32 %s20, %s32
      %p193 = scmp.eq.s32.totalorder %s192, 0
      %s195 = sadd.s32 %s194, 1
      %s196 = scalar_select %p193, %s194, %s195
      %p199 = pneg %p193
      %p200 = scmp.eq.s32.totalorder %s13, 5
      %p201 = por %p199, %p200
      %p202 = scmp.ne.s32.totalorder %s194, %s197
      %p203 = scmp.eq.s32.totalorder %s13, 0
      %p204 = por %p202, %p203
      %p205 = scmp.ne.s32.totalorder %s194, %s197
      %p206 = scmp.eq.s32.totalorder %s18, 5
      %p207 = por %p205, %p206
      %p208 = scmp.ne.s32.totalorder %s197, %s198
      %p209 = scmp.eq.s32.totalorder %s18, 0
      %p210 = por %p208, %p209
      %p211 = scmp.ne.s32.totalorder %s197, %s198
      %p212 = scmp.eq.s32.totalorder %s19, 5
      %p213 = por %p211, %p212
      %p215 = scmp.ne.s32.totalorder %s198, %s214
      %p216 = scmp.eq.s32.totalorder %s19, 0
      %p217 = por %p215, %p216
      %p218 = scmp.le.s32.totalorder 1, %s13
      %p219 = scmp.lt.s32.totalorder %s13, 7
      %p220 = pnand %p218, %p219
      %p221 = pneg %p220
      // Predicated region
      $region9: #{coords_net_forward.1} parent=5 // pred_check
        _
      $region10: #{coords_net_forward.1} parent=5 // pred_check_branch
        %223 = sbr.rel (%p220) target = $region12
      $region11: #{coords_net_forward.1} parent=5 // pred_region
        %s224 = ssub.s32 %s13, 1
        // Predicated region
        $region13: #{coords_net_forward.1} parent=11 // pred_check
          %p225 = pneg %p74
        $region14: #{coords_net_forward.1} parent=11 // pred_check_branch
          %227 = sbr.rel (%p225) target = $region16
        $region15: #{coords_net_forward.1} parent=11 // pred_region
          _
        $region16: #{coords_net_forward.1} parent=11 // pred_fallthru
          _
        // Predicated region
        $region17: #{coords_net_forward.1} parent=11 // pred_check
          %p228 = pneg %p95
        $region18: #{coords_net_forward.1} parent=11 // pred_check_branch
          %230 = sbr.rel (%p228) target = $region20
        $region19: #{coords_net_forward.1} parent=11 // pred_region
          _
        $region20: #{coords_net_forward.1} parent=11 // pred_fallthru
          _
        // Predicated region
        $region21: #{coords_net_forward.1} parent=11 // pred_check
          %p231 = pneg %p142
        $region22: #{coords_net_forward.1} parent=11 // pred_check_branch
          %233 = sbr.rel (%p231) target = $region24
        $region23: #{coords_net_forward.1} parent=11 // pred_region
          _
        $region24: #{coords_net_forward.1} parent=11 // pred_fallthru
          _
        // Predicated region
        $region25: #{coords_net_forward.1} parent=11 // pred_check
          %p234 = pneg %p163
        $region26: #{coords_net_forward.1} parent=11 // pred_check_branch
          %236 = sbr.rel (%p234) target = $region28
        $region27: #{coords_net_forward.1} parent=11 // pred_region
          _
        $region28: #{coords_net_forward.1} parent=11 // pred_fallthru
          _
        // Predicated region
        $region29: #{coords_net_forward.1} parent=11 // pred_check
          %p237 = pneg %p184
        $region30: #{coords_net_forward.1} parent=11 // pred_check_branch
          %239 = sbr.rel (%p237) target = $region32
        $region31: #{coords_net_forward.1} parent=11 // pred_region
          _
        $region32: #{coords_net_forward.1} parent=11 // pred_fallthru
          _
      $region12: #{coords_net_forward.1} parent=5 // pred_fallthru
        _
      %p240 = scmp.lt.s32.totalorder %s13, 6
      // Predicated region
      $region33: #{coords_net_forward.1} parent=5 // pred_check
        %p241 = pneg %p240
      $region34: #{coords_net_forward.1} parent=5 // pred_check_branch
        %243 = sbr.rel (%p241) target = $region36
      $region35: #{coords_net_forward.1} parent=5 // pred_region
        // Predicated region
        $region37: #{coords_net_forward.1} parent=35 // pred_check
          %p244 = pneg %p47
        $region38: #{coords_net_forward.1} parent=35 // pred_check_branch
          %246 = sbr.rel (%p244) target = $region40
        $region39: #{coords_net_forward.1} parent=35 // pred_region
          %s247 = sand.u32 %s37, 1
          %s248 = sand.u32 %s37, 1
          %s249 = smul.addr %s248, 8
          %s250 = scalar_lea.vmem [#allocation3], %s249
          %s251 = smul.u32 2, %s20
          %s252 = smul.u32 2, %s21
          %s253 = smul.addr %s251, 12
          %s254 = sadd.s32 %s252, %s253
          %s255 = smul.addr %s254, 2
          %s256 = scalar_lea.vmem %s0, %s255
          // Predicated region
          $region41: #{coords_net_forward.1} parent=39 // pred_check
            _
          $region42: #{coords_net_forward.1} parent=39 // pred_check_branch
            %258 = sbr.rel (0) target = $region44
          $region43: #{coords_net_forward.1} parent=39 // pred_region
            // Predicated region
            $region45: #{coords_net_forward.1} parent=43 // pred_check
              _
            $region46: #{coords_net_forward.1} parent=43 // pred_check_branch
              %260 = sbr.rel target = $region48
            $region47: #{coords_net_forward.1} parent=43 // pred_region
              // Predicated region
              $region60: #{coords_net_forward.1} parent=47 // pred_check
                _
              $region61: #{coords_net_forward.1} parent=47 // pred_check_branch
                %277 = sbr.rel (0) target = $region63
              $region62: #{coords_net_forward.1} parent=47 // pred_region
                loop: start=0, step=1, limit=1
                $region64: #{coords_net_forward.1} parent=62 // loop_pre_header
                  _
                $region65: #{coords_net_forward.1} parent=62 // loop_header
                  %s279 = sphi 0, %s283
                  %p280 = scmp.ge.s32.totalorder %s279, 1
                  %s284 = sphi %s256, %s256
                  %s285 = sphi %s250, %s250
                $region66: #{coords_net_forward.1} parent=62 // loop_header_branch
                  %282 = sbr.rel (%p280) target = $region70
                $region67: #{coords_net_forward.1} parent=62 // loop_body
                  _
                $region68: #{coords_net_forward.1} parent=62 // loop_footer
                  %s283 = sadd.s32 1, %s279
                $region69: #{coords_net_forward.1} parent=62 // loop_footer_branch
                  %278 = sbr.rel target = $region65
                $region70: #{coords_net_forward.1} parent=62 // loop_exit
                  _
                loop: start=0, step=1, limit=1
                $region71: #{coords_net_forward.1} parent=62 // loop_pre_header
                  _
                $region72: #{coords_net_forward.1} parent=62 // loop_header
                  %s288 = sphi 0, %s292
                  %p289 = scmp.ge.s32.totalorder %s288, 1
                  %s293 = sphi %s256, %s256
                  %s294 = sphi %s250, %s250
                $region73: #{coords_net_forward.1} parent=62 // loop_header_branch
                  %291 = sbr.rel (%p289) target = $region77
                $region74: #{coords_net_forward.1} parent=62 // loop_body
                  %v295 = vld [vmem:[%s293] sm:$0xf]
                  %296 = vst [vmem:[%s294] sm:$0xf] %v295
                  %v297 = vld [vmem:[%s293 + $0x18] sm:$0xf]
                  %298 = vst [vmem:[%s294 + $0x4] sm:$0xf] %v297
                $region75: #{coords_net_forward.1} parent=62 // loop_footer
                  %s292 = sadd.s32 1, %s288
                $region76: #{coords_net_forward.1} parent=62 // loop_footer_branch
                  %287 = sbr.rel target = $region72
                $region77: #{coords_net_forward.1} parent=62 // loop_exit
                  _
              $region63: #{coords_net_forward.1} parent=47 // pred_fallthru
                _
            $region48: #{coords_net_forward.1} parent=43 // pred_fallthru
              _
            // Predicated region
            $region49: #{coords_net_forward.1} parent=43 // pred_check
              _
            $region50: #{coords_net_forward.1} parent=43 // pred_check_branch
              %262 = sbr.rel (0) target = $region52
            $region51: #{coords_net_forward.1} parent=43 // pred_region
              loop: start=0, step=1, limit=1
              $region53: #{coords_net_forward.1} parent=51 // loop_pre_header
                _
              $region54: #{coords_net_forward.1} parent=51 // loop_header
                %s265 = sphi 0, %s269
                %p266 = scmp.ge.s32.totalorder %s265, 1
                %s270 = sphi %s256, %s256
                %s271 = sphi %s250, %s250
              $region55: #{coords_net_forward.1} parent=51 // loop_header_branch
                %268 = sbr.rel (%p266) target = $region59
              $region56: #{coords_net_forward.1} parent=51 // loop_body
                %v272 = vld [vmem:[%s270] sm:$0xf]
                %273 = vst [vmem:[%s271] sm:$0xf] %v272
                %v274 = vld [vmem:[%s270 + $0x18] sm:$0xf]
                %275 = vst [vmem:[%s271 + $0x4] sm:$0xf] %v274
              $region57: #{coords_net_forward.1} parent=51 // loop_footer
                %s269 = sadd.s32 1, %s265
              $region58: #{coords_net_forward.1} parent=51 // loop_footer_branch
                %264 = sbr.rel target = $region54
              $region59: #{coords_net_forward.1} parent=51 // loop_exit
                _
            $region52: #{coords_net_forward.1} parent=43 // pred_fallthru
              _
          $region44: #{coords_net_forward.1} parent=39 // pred_fallthru
            _
          %299 = vnop
        $region40: #{coords_net_forward.1} parent=35 // pred_fallthru
          _
        // Predicated region
        $region78: #{coords_net_forward.1} parent=35 // pred_check
          %p300 = pneg %p115
        $region79: #{coords_net_forward.1} parent=35 // pred_check_branch
          %302 = sbr.rel (%p300) target = $region81
        $region80: #{coords_net_forward.1} parent=35 // pred_region
          %s303 = smul.u32 16, %s21
          %p304 = scmp.lt.s32.totalorder %s303, 95
          %s305 = scalar_select %p304, %s303, 95
          %s306 = smul.addr %s305, 4
          %s307 = scalar_lea.vmem %s3, %s306
          %s308 = smul.u32 16, %s21
        $region81: #{coords_net_forward.1} parent=35 // pred_fallthru
          _
      $region36: #{coords_net_forward.1} parent=5 // pred_fallthru
        _
      %p309 = scmp.le.s32.totalorder 1, %s13
      %p310 = scmp.lt.s32.totalorder %s13, 7
      %p311 = pnand %p309, %p310
      %p312 = pneg %p311
      // Predicated region
      $region82: #{coords_net_forward.1} parent=5 // pred_check
        _
      $region83: #{coords_net_forward.1} parent=5 // pred_check_branch
        %314 = sbr.rel (%p311) target = $region85
      $region84: #{coords_net_forward.1} parent=5 // pred_region
        %s315 = ssub.s32 %s13, 1
        %s316 = sand.u32 %s40, 1
        %s317 = sand.u32 %s40, 1
        %s318 = smul.addr %s317, 8
        %s319 = scalar_lea.vmem [#allocation3], %s318
        // Predicated region
        $region86: #{coords_net_forward.1} parent=84 // pred_check
          %p320 = pneg %p53
        $region87: #{coords_net_forward.1} parent=84 // pred_check_branch
          %322 = sbr.rel (%p320) target = $region89
        $region88: #{coords_net_forward.1} parent=84 // pred_region
          _
        $region89: #{coords_net_forward.1} parent=84 // pred_fallthru
          _
        %s323 = sand.u32 %s40, 1
        %s324 = sand.u32 %s40, 1
        %s325 = smul.addr %s324, 8
        %s326 = scalar_lea.vmem [#allocation3], %s325
        %p327 = pneg %p53
        %p328 = pneg %p50
        %p329 = pneg %p74
        %p330 = pneg %p71
        %p331 = pneg %p95
        %p332 = pneg %p92
        %s333 = smul.u32 16, %s23
        %p334 = scmp.lt.s32.totalorder %s333, 95
        %s335 = scalar_select %p334, %s333, 95
        %s336 = smul.addr %s335, 4
        %s337 = scalar_lea.vmem %s3, %s336
        %p338 = pneg %p121
        %p339 = pneg %p118
        %p340 = pneg %p142
        %p341 = pneg %p139
        %p342 = pneg %p163
        %p343 = pneg %p160
        %p344 = pneg %p184
        %p345 = pneg %p181
        %p346 = pneg %p210
        %p347 = pneg %p207
        %p348 = scmp.lt.s32.totalorder %s22, 0
        %s349 = scalar_select %p348, %s22, 0
        %s350 = smul.addr %s349, 2
        %s351 = scalar_lea.vmem %s7, %s350
        %s352 = smul.u32 2, %s22
        %s353 = smul.u32 2, %s23
        %s354 = smul.u32 16, %s23
        %p355 = scmp.lt.s32.totalorder %s354, 95
        %s356 = scalar_select %p355, %s354, 95
        %s357 = smul.addr %s356, 4
        %s358 = scalar_lea.vmem %s3, %s357
        %s359 = smul.u32 16, %s23
        %p360 = scmp.lt.s32.totalorder %s22, 0
        %s361 = scalar_select %p360, %s22, 0
        %s362 = smul.addr %s361, 2
        %s363 = scalar_lea.vmem %s7, %s362
        %p365 = scmp.eq.s32.totalorder %s23, 0
        // Predicated region
        $region90: #{coords_net_forward.1} parent=84 // pred_check
          %p366 = pneg %p365
        $region91: #{coords_net_forward.1} parent=84 // pred_check_branch
          %368 = sbr.rel (%p366) target = $region93
        $region92: #{coords_net_forward.1} parent=84 // pred_region
          %369 = vst [vmem:[#allocation2] sm:$0x3] 0.0
        $region93: #{coords_net_forward.1} parent=84 // pred_fallthru
          _
        %v370 = vld [vmem:[%s319] sm:$0xf]
        %v371 = vld [vmem:[%s319 + $0x4] sm:$0xf]
        %v372 = vunpack.c.l.bf16 %v370
        %v373 = vunpack.c.l.bf16 %v371
        %v374 = vmul.f32 %v372, 0.5
        %v375 = vmul.f32 %v373, 0.5
        %v376 = vtanh.pop %v374
        %v377 = vtanh.pop %v375
        %v378 = vadd.f32 %v376, 1.0
        %v379 = vadd.f32 %v377, 1.0
        %v380 = vmul.f32 %v374, %v378
        %v381 = vmul.f32 %v375, %v379
        %v384 = vrot.slane %v380, 5
        %v385 = vrot.slane %v384, 4
        %v386 = vrot.slane %v381, 5
        %v387 = vrot.slane %v386, 4
        %v390 = vmax.f32 %v380, %v385
        %v391 = vmax.f32 %v381, %v387
        %v392 = vrot.slane %v380, 6
        %v393 = vrot.slane %v392, 4
        %v394 = vrot.slane %v381, 6
        %v395 = vrot.slane %v394, 4
        %v398 = vmax.f32 %v390, %v393
        %v399 = vmax.f32 %v391, %v395
        %v400 = vrot.slane %v380, 7
        %v401 = vrot.slane %v400, 4
        %v402 = vrot.slane %v381, 7
        %v403 = vrot.slane %v402, 4
        %v406 = vmax.f32 %v398, %v401
        %v407 = vmax.f32 %v399, %v403
        %v410 = vlaneseq
        %v411 = vshrl.u32 %v410, 7
        %v412 = vsub.s32 0, %v411
        %v413 = vrot.slane %v406, %v412
        %v414 = vlaneseq
        %v415 = vshrl.u32 %v414, 7
        %v416 = vsub.s32 4, %v415
        %v417 = vrot.slane %v406, %v416
        %v418 = vlaneseq
        %v419 = vshrl.u32 %v418, 7
        %v420 = vsub.s32 0, %v419
        %v421 = vrot.slane %v407, %v420
        %v422 = vlaneseq
        %v423 = vshrl.u32 %v422, 7
        %v424 = vsub.s32 4, %v423
        %v425 = vrot.slane %v407, %v424
        %v430 = vpack.c.bf16 %v413, %v413
        %v431 = vpack.c.bf16 %v417, %v417
        %v432 = vpack.c.bf16 %v421, %v421
        %v433 = vpack.c.bf16 %v425, %v425
        %v434 = vld [vmem:[%s1] sm:$0xf]
        %v435 = vld [vmem:[%s1 + $0x4] sm:$0xf]
        %v436 = vld [vmem:[%s1 + $0x8] sm:$0xf]
        %v437 = vld [vmem:[%s1 + $0xc] sm:$0xf]
        %v438 = vld [vmem:[%s1 + $0x10] sm:$0xf]
        %v439 = vld [vmem:[%s1 + $0x14] sm:$0xf]
        %v440 = vld [vmem:[%s1 + $0x18] sm:$0xf]
        %v441 = vld [vmem:[%s1 + $0x1c] sm:$0xf]
        %v442 = vld [vmem:[%s1 + $0x20] sm:$0xf]
        %v443 = vld [vmem:[%s1 + $0x24] sm:$0xf]
        %v444 = vld [vmem:[%s1 + $0x28] sm:$0xf]
        %v445 = vld [vmem:[%s1 + $0x2c] sm:$0xf]
        %v446 = vld [vmem:[%s1 + $0x30] sm:$0xf]
        %v447 = vld [vmem:[%s1 + $0x34] sm:$0xf]
        %v448 = vld [vmem:[%s1 + $0x38] sm:$0xf]
        %v449 = vld [vmem:[%s1 + $0x3c] sm:$0xf]
        %v450 = vld [vmem:[%s1 + $0x40] sm:$0xf]
        %v451 = vld [vmem:[%s1 + $0x44] sm:$0xf]
        %v452 = vld [vmem:[%s1 + $0x48] sm:$0xf]
        %v453 = vld [vmem:[%s1 + $0x4c] sm:$0xf]
        %v454 = vld [vmem:[%s1 + $0x50] sm:$0xf]
        %v455 = vld [vmem:[%s1 + $0x54] sm:$0xf]
        %v456 = vld [vmem:[%s1 + $0x58] sm:$0xf]
        %v457 = vld [vmem:[%s1 + $0x5c] sm:$0xf]
        %v458 = vld [vmem:[%s1 + $0x60] sm:$0xf]
        %v459 = vld [vmem:[%s1 + $0x64] sm:$0xf]
        %v460 = vld [vmem:[%s1 + $0x68] sm:$0xf]
        %v461 = vld [vmem:[%s1 + $0x6c] sm:$0xf]
        %v462 = vld [vmem:[%s1 + $0x70] sm:$0xf]
        %v463 = vld [vmem:[%s1 + $0x74] sm:$0xf]
        %v464 = vld [vmem:[%s1 + $0x78] sm:$0xf]
        %v465 = vld [vmem:[%s1 + $0x7c] sm:$0xf]
        %v466 = vld [vmem:[%s2] sm:$0x1]
        %v468 = vlaneseq
        %v469 = vshrl.u32 %v468, 7
        %v470 = vsub.s32 0, %v469
        %v471 = vrot.slane %v466, %v470
        %v477 = vunpack.c.l.b16 %v430
        %v478 = vunpack.c.l.b16 %v431
        %v479 = vunpack.c.l.b16 %v432
        %v480 = vunpack.c.l.b16 %v433
        %v481 = vrot.slane %v479, 7
        %vm482 = vcmask 1041409
        %v483 = vsel %vm482, %v481, %v477
        %v484 = vrot.slane %v480, 7
        %v485 = vsel %vm482, %v484, %v478
        %v486 = vpack.c.b16 %v483, %v483
        %v487 = vpack.c.b16 %v485, %v485
        %v522 = vunpack.c.l.b16 %v434
        %v523 = vunpack.c.l.b16 %v435
        %v524 = vunpack.c.l.b16 %v436
        %v525 = vunpack.c.l.b16 %v437
        %v526 = vunpack.c.l.b16 %v438
        %v527 = vunpack.c.l.b16 %v439
        %v528 = vunpack.c.l.b16 %v440
        %v529 = vunpack.c.l.b16 %v441
        %v530 = vunpack.c.l.b16 %v442
        %v531 = vunpack.c.l.b16 %v443
        %v532 = vunpack.c.l.b16 %v444
        %v533 = vunpack.c.l.b16 %v445
        %v534 = vunpack.c.l.b16 %v446
        %v535 = vunpack.c.l.b16 %v447
        %v536 = vunpack.c.l.b16 %v448
        %v537 = vunpack.c.l.b16 %v449
        %v538 = vunpack.c.l.b16 %v450
        %v539 = vunpack.c.l.b16 %v451
        %v540 = vunpack.c.l.b16 %v452
        %v541 = vunpack.c.l.b16 %v453
        %v542 = vunpack.c.l.b16 %v454
        %v543 = vunpack.c.l.b16 %v455
        %v544 = vunpack.c.l.b16 %v456
        %v545 = vunpack.c.l.b16 %v457
        %v546 = vunpack.c.l.b16 %v458
        %v547 = vunpack.c.l.b16 %v459
        %v548 = vunpack.c.l.b16 %v460
        %v549 = vunpack.c.l.b16 %v461
        %v550 = vunpack.c.l.b16 %v462
        %v551 = vunpack.c.l.b16 %v463
        %v552 = vunpack.c.l.b16 %v464
        %v553 = vunpack.c.l.b16 %v465
        %v554 = vpack.c.b16 %v523, %v522
        %v555 = vpack.c.b16 %v525, %v524
        %v556 = vpack.c.b16 %v527, %v526
        %v557 = vpack.c.b16 %v529, %v528
        %v558 = vpack.c.b16 %v531, %v530
        %v559 = vpack.c.b16 %v533, %v532
        %v560 = vpack.c.b16 %v535, %v534
        %v561 = vpack.c.b16 %v537, %v536
        %v562 = vpack.c.b16 %v539, %v538
        %v563 = vpack.c.b16 %v541, %v540
        %v564 = vpack.c.b16 %v543, %v542
        %v565 = vpack.c.b16 %v545, %v544
        %v566 = vpack.c.b16 %v547, %v546
        %v567 = vpack.c.b16 %v549, %v548
        %v568 = vpack.c.b16 %v551, %v550
        %v569 = vpack.c.b16 %v553, %v552
        %586 = vmatprep.subr.bf16.mxu0 0
        %587 = vmatpush1.bf16.msra.mxu0 %v554
        %588 = vmatprep.subr.bf16.mxu0 0
        %589 = vmatpush1.bf16.msra.mxu0 %v555
        %590 = vmatprep.subr.bf16.mxu0 0
        %591 = vmatpush1.bf16.msra.mxu0 %v556
        %592 = vmatprep.subr.bf16.mxu0 0
        %593 = vmatpush1.bf16.msra.mxu0 %v557
        %594 = vmatprep.subr.bf16.mxu0 0
        %595 = vmatpush1.bf16.msra.mxu0 %v558
        %596 = vmatprep.subr.bf16.mxu0 0
        %597 = vmatpush1.bf16.msra.mxu0 %v559
        %598 = vmatprep.subr.bf16.mxu0 0
        %599 = vmatpush1.bf16.msra.mxu0 %v560
        %600 = vmatprep.subr.bf16.mxu0 0
        %601 = vmatpush1.bf16.msra.mxu0 %v561
        %602 = vmatprep.subr.bf16.mxu0 0
        %603 = vmatpush1.bf16.msra.mxu0 %v562
        %604 = vmatprep.subr.bf16.mxu0 0
        %605 = vmatpush1.bf16.msra.mxu0 %v563
        %606 = vmatprep.subr.bf16.mxu0 0
        %607 = vmatpush1.bf16.msra.mxu0 %v564
        %608 = vmatprep.subr.bf16.mxu0 0
        %609 = vmatpush1.bf16.msra.mxu0 %v565
        %610 = vmatprep.subr.bf16.mxu0 0
        %611 = vmatpush1.bf16.msra.mxu0 %v566
        %612 = vmatprep.subr.bf16.mxu0 0
        %613 = vmatpush1.bf16.msra.mxu0 %v567
        %614 = vmatprep.subr.bf16.mxu0 0
        %615 = vmatpush1.bf16.msra.mxu0 %v568
        %616 = vmatprep.subr.bf16.mxu0 0
        %617 = vmatpush1.bf16.msra.mxu0 %v569
        %618 = vmatprep.mubr.bf16.mxu0 %v487
        %619 = vmatmul.mubr.bf16.gmra.mrb[0].mxu0 %v486
        %v620 = vpop.f32.mrb[0].mxu0
        %v621 = vadd.f32 %v471, %v620
        %v622 = vpop.f32.mrb[0].mxu0
        %v623 = vpop.f32.mrb[0].mxu0
        %v624 = vpop.f32.mrb[0].mxu0
        %625 = vdwg.mxu0
        %v626 = vmul.f32 %v621, 0.5
        %v627 = vtanh.pop %v626
        %v628 = vadd.f32 %v627, 1.0
        %v629 = vmul.f32 %v626, %v628
        %v630 = vld [vmem:[#allocation2] sm:$0x3]
        %v631 = vpack.c.bf16 %v629, %v629
        %v632 = vld [vmem:[%s358] sm:$0xf]
        %v633 = vld [vmem:[%s358 + $0x4] sm:$0xf]
        %v634 = vld [vmem:[%s358 + $0x8] sm:$0xf]
        %v635 = vld [vmem:[%s358 + $0xc] sm:$0xf]
        %v636 = vld [vmem:[%s358 + $0x10] sm:$0xf]
        %v637 = vld [vmem:[%s358 + $0x14] sm:$0xf]
        %v638 = vld [vmem:[%s358 + $0x18] sm:$0xf]
        %v639 = vld [vmem:[%s358 + $0x1c] sm:$0xf]
        %v640 = vld [vmem:[%s358 + $0x20] sm:$0xf]
        %v641 = vld [vmem:[%s358 + $0x24] sm:$0xf]
        %v642 = vld [vmem:[%s358 + $0x28] sm:$0xf]
        %v643 = vld [vmem:[%s358 + $0x2c] sm:$0xf]
        %v644 = vld [vmem:[%s358 + $0x30] sm:$0xf]
        %v645 = vld [vmem:[%s358 + $0x34] sm:$0xf]
        %v646 = vld [vmem:[%s358 + $0x38] sm:$0xf]
        %v647 = vld [vmem:[%s358 + $0x3c] sm:$0xf]
        %v664 = vunpack.c.l.b16 %v632
        %v665 = vunpack.c.l.b16 %v633
        %v666 = vunpack.c.l.b16 %v634
        %v667 = vunpack.c.l.b16 %v635
        %v668 = vunpack.c.l.b16 %v636
        %v669 = vunpack.c.l.b16 %v637
        %v670 = vunpack.c.l.b16 %v638
        %v671 = vunpack.c.l.b16 %v639
        %v672 = vunpack.c.l.b16 %v640
        %v673 = vunpack.c.l.b16 %v641
        %v674 = vunpack.c.l.b16 %v642
        %v675 = vunpack.c.l.b16 %v643
        %v676 = vunpack.c.l.b16 %v644
        %v677 = vunpack.c.l.b16 %v645
        %v678 = vunpack.c.l.b16 %v646
        %v679 = vunpack.c.l.b16 %v647
        %v680 = vpack.c.b16 %v665, %v664
        %v681 = vpack.c.b16 %v667, %v666
        %v682 = vpack.c.b16 %v669, %v668
        %v683 = vpack.c.b16 %v671, %v670
        %v684 = vpack.c.b16 %v673, %v672
        %v685 = vpack.c.b16 %v675, %v674
        %v686 = vpack.c.b16 %v677, %v676
        %v687 = vpack.c.b16 %v679, %v678
        %696 = vmatprep.subr.bf16.mxu0 0
        %697 = vmatpush1.bf16.msra.mxu0 %v680
        %698 = vmatprep.subr.bf16.mxu0 0
        %699 = vmatpush1.bf16.msra.mxu0 %v681
        %700 = vmatprep.subr.bf16.mxu0 0
        %701 = vmatpush1.bf16.msra.mxu0 %v682
        %702 = vmatprep.subr.bf16.mxu0 0
        %703 = vmatpush1.bf16.msra.mxu0 %v683
        %704 = vmatprep.subr.bf16.mxu0 0
        %705 = vmatpush1.bf16.msra.mxu0 %v684
        %706 = vmatprep.subr.bf16.mxu0 0
        %707 = vmatpush1.bf16.msra.mxu0 %v685
        %708 = vmatprep.subr.bf16.mxu0 0
        %709 = vmatpush1.bf16.msra.mxu0 %v686
        %710 = vmatprep.subr.bf16.mxu0 0
        %711 = vmatpush1.bf16.msra.mxu0 %v687
        %712 = vmatprep.subr.bf16.mxu0 0
        %713 = vmatpush1.bf16.msra.mxu0 0
        %714 = vmatprep.subr.bf16.mxu0 0
        %715 = vmatpush1.bf16.msra.mxu0 0
        %716 = vmatprep.subr.bf16.mxu0 0
        %717 = vmatpush1.bf16.msra.mxu0 0
        %718 = vmatprep.subr.bf16.mxu0 0
        %719 = vmatpush1.bf16.msra.mxu0 0
        %720 = vmatprep.subr.bf16.mxu0 0
        %721 = vmatpush1.bf16.msra.mxu0 0
        %722 = vmatprep.subr.bf16.mxu0 0
        %723 = vmatpush1.bf16.msra.mxu0 0
        %724 = vmatprep.subr.bf16.mxu0 0
        %725 = vmatpush1.bf16.msra.mxu0 0
        %726 = vmatprep.subr.bf16.mxu0 0
        %727 = vmatpush1.bf16.msra.mxu0 0
        %728 = vmatprep.mubr.bf16.mxu0 0
        %729 = vmatmul.mubr.bf16.gmra.mrb[0].mxu0 %v631
        %v730 = vpop.f32.mrb[0].mxu0
        %v731 = vadd.f32 0.0, %v730
        %v732 = vpop.f32.mrb[0].mxu0
        %v733 = vpop.f32.mrb[0].mxu0
        %v734 = vpop.f32.mrb[0].mxu0
        %735 = vdwg.mxu0
        %v736 = vadd.f32 %v630, %v731
        %737 = vst [vmem:[#allocation2] sm:$0x3] %v736
        %p738 = scmp.eq.s32.totalorder %s23, 5
        // Predicated region
        $region94: #{coords_net_forward.1} parent=84 // pred_check
          %p739 = pneg %p738
        $region95: #{coords_net_forward.1} parent=84 // pred_check_branch
          %741 = sbr.rel (%p739) target = $region97
        $region96: #{coords_net_forward.1} parent=84 // pred_region
          %v742 = vld [vmem:[#allocation2] sm:$0x3]
          %v743 = vld [vmem:[%s4] sm:$0x1]
          %v745 = vlaneseq
          %v746 = vshrl.u32 %v745, 7
          %v747 = vsub.s32 0, %v746
          %v748 = vrot.slane %v743, %v747
          %v750 = vadd.f32 %v742, %v748
          %v751 = vmul.f32 %v750, 0.5
          %v752 = vtanh.pop %v751
          %v753 = vadd.f32 %v752, 1.0
          %v754 = vmul.f32 %v751, %v753
          %v755 = vpack.c.bf16 %v754, %v754
          %v756 = vld [vmem:[%s5] sm:$0xf]
          %v757 = vld [vmem:[%s5 + $0x4] sm:$0xf]
          %v758 = vld [vmem:[%s5 + $0x8] sm:$0xf]
          %v759 = vld [vmem:[%s5 + $0xc] sm:$0xf]
          %v760 = vld [vmem:[%s5 + $0x10] sm:$0xf]
          %v761 = vld [vmem:[%s5 + $0x14] sm:$0xf]
          %v762 = vld [vmem:[%s5 + $0x18] sm:$0xf]
          %v763 = vld [vmem:[%s5 + $0x1c] sm:$0xf]
          %v764 = vld [vmem:[%s5 + $0x20] sm:$0xf]
          %v765 = vld [vmem:[%s5 + $0x24] sm:$0xf]
          %v766 = vld [vmem:[%s5 + $0x28] sm:$0xf]
          %v767 = vld [vmem:[%s5 + $0x2c] sm:$0xf]
          %v768 = vld [vmem:[%s5 + $0x30] sm:$0xf]
          %v769 = vld [vmem:[%s5 + $0x34] sm:$0xf]
          %v770 = vld [vmem:[%s5 + $0x38] sm:$0xf]
          %v771 = vld [vmem:[%s5 + $0x3c] sm:$0xf]
          %v772 = vld [vmem:[%s6] sm:$0x1]
          %v774 = vlaneseq
          %v775 = vshrl.u32 %v774, 7
          %v776 = vsub.s32 0, %v775
          %v777 = vrot.slane %v772, %v776
          %v795 = vunpack.c.l.b16 %v756
          %v796 = vunpack.c.l.b16 %v757
          %v797 = vunpack.c.l.b16 %v758
          %v798 = vunpack.c.l.b16 %v759
          %v799 = vunpack.c.l.b16 %v760
          %v800 = vunpack.c.l.b16 %v761
          %v801 = vunpack.c.l.b16 %v762
          %v802 = vunpack.c.l.b16 %v763
          %v803 = vunpack.c.l.b16 %v764
          %v804 = vunpack.c.l.b16 %v765
          %v805 = vunpack.c.l.b16 %v766
          %v806 = vunpack.c.l.b16 %v767
          %v807 = vunpack.c.l.b16 %v768
          %v808 = vunpack.c.l.b16 %v769
          %v809 = vunpack.c.l.b16 %v770
          %v810 = vunpack.c.l.b16 %v771
          %v811 = vpack.c.b16 %v796, %v795
          %v812 = vpack.c.b16 %v798, %v797
          %v813 = vpack.c.b16 %v800, %v799
          %v814 = vpack.c.b16 %v802, %v801
          %v815 = vpack.c.b16 %v804, %v803
          %v816 = vpack.c.b16 %v806, %v805
          %v817 = vpack.c.b16 %v808, %v807
          %v818 = vpack.c.b16 %v810, %v809
          %827 = vmatprep.subr.bf16.mxu0 0
          %828 = vmatpush1.bf16.msra.mxu0 %v811
          %829 = vmatprep.subr.bf16.mxu0 0
          %830 = vmatpush1.bf16.msra.mxu0 %v812
          %831 = vmatprep.subr.bf16.mxu0 0
          %832 = vmatpush1.bf16.msra.mxu0 %v813
          %833 = vmatprep.subr.bf16.mxu0 0
          %834 = vmatpush1.bf16.msra.mxu0 %v814
          %835 = vmatprep.subr.bf16.mxu0 0
          %836 = vmatpush1.bf16.msra.mxu0 %v815
          %837 = vmatprep.subr.bf16.mxu0 0
          %838 = vmatpush1.bf16.msra.mxu0 %v816
          %839 = vmatprep.subr.bf16.mxu0 0
          %840 = vmatpush1.bf16.msra.mxu0 %v817
          %841 = vmatprep.subr.bf16.mxu0 0
          %842 = vmatpush1.bf16.msra.mxu0 %v818
          %843 = vmatprep.subr.bf16.mxu0 0
          %844 = vmatpush1.bf16.msra.mxu0 0
          %845 = vmatprep.subr.bf16.mxu0 0
          %846 = vmatpush1.bf16.msra.mxu0 0
          %847 = vmatprep.subr.bf16.mxu0 0
          %848 = vmatpush1.bf16.msra.mxu0 0
          %849 = vmatprep.subr.bf16.mxu0 0
          %850 = vmatpush1.bf16.msra.mxu0 0
          %851 = vmatprep.subr.bf16.mxu0 0
          %852 = vmatpush1.bf16.msra.mxu0 0
          %853 = vmatprep.subr.bf16.mxu0 0
          %854 = vmatpush1.bf16.msra.mxu0 0
          %855 = vmatprep.subr.bf16.mxu0 0
          %856 = vmatpush1.bf16.msra.mxu0 0
          %857 = vmatprep.subr.bf16.mxu0 0
          %858 = vmatpush1.bf16.msra.mxu0 0
          %859 = vmatprep.mubr.bf16.mxu0 0
          %860 = vmatmul.mubr.bf16.gmra.mrb[0].mxu0 %v755
          %v861 = vpop.f32.mrb[0].mxu0
          %v862 = vadd.f32 %v777, %v861
          %v863 = vpop.f32.mrb[0].mxu0
          %v864 = vpop.f32.mrb[0].mxu0
          %v865 = vpop.f32.mrb[0].mxu0
          %866 = vdwg.mxu0
          %867 = vst [vmem:[%s363] sm:$0x3] %v862
        $region97: #{coords_net_forward.1} parent=84 // pred_fallthru
          _
        %p868 = scmp.lt.s32.totalorder %s22, 0
        %s869 = scalar_select %p868, %s22, 0
        %s870 = smul.addr %s869, 2
        %s871 = scalar_lea.vmem %s7, %s870
        // Predicated region
        $region98: #{coords_net_forward.1} parent=84 // pred_check
          %p872 = pneg %p207
        $region99: #{coords_net_forward.1} parent=84 // pred_check_branch
          %874 = sbr.rel (%p872) target = $region101
        $region100: #{coords_net_forward.1} parent=84 // pred_region
          _
        $region101: #{coords_net_forward.1} parent=84 // pred_fallthru
          _
        // Predicated region
        $region102: #{coords_net_forward.1} parent=84 // pred_check
          %p875 = pneg %p207
        $region103: #{coords_net_forward.1} parent=84 // pred_check_branch
          %877 = sbr.rel (%p875) target = $region105
        $region104: #{coords_net_forward.1} parent=84 // pred_region
          %p878 = scmp.lt.s32.totalorder %s22, 0
          %s879 = scalar_select %p878, %s22, 0
          %s880 = smul.addr %s879, 2
          %s881 = scalar_lea.vmem %s7, %s880
        $region105: #{coords_net_forward.1} parent=84 // pred_fallthru
          _
      $region85: #{coords_net_forward.1} parent=5 // pred_fallthru
        _
      %p882 = scmp.le.s32.totalorder 2, %s13
      // Predicated region
      $region106: #{coords_net_forward.1} parent=5 // pred_check
        %p883 = pneg %p882
      $region107: #{coords_net_forward.1} parent=5 // pred_check_branch
        %885 = sbr.rel (%p883) target = $region109
      $region108: #{coords_net_forward.1} parent=5 // pred_region
        %s886 = ssub.s32 %s13, 2
      $region109: #{coords_net_forward.1} parent=5 // pred_fallthru
        _
    $region6: #{coords_net_forward.1} parent=1 // loop_footer
      %s17 = sadd.s32 1, %s13
    $region7: #{coords_net_forward.1} parent=1 // loop_footer_branch
      %12 = sbr.rel target = $region3
    $region8: #{coords_net_forward.1} parent=1 // loop_exit
      _

</llo_original>
